<compile_context>
chip_gen: v5e
topology: v5e:2x2
jax: 0.10.0
libtpu: 0.0.40
codegen_flags: <defaults>
</compile_context>

<pallas_src>
import functools

import jax
import jax.numpy as jnp
from jax import lax
from jax.experimental import pallas as pl
from jax.experimental.pallas import tpu as pltpu

_GN_EPS = 1e-5  # torch.nn.GroupNorm default


def _make_transition_kernel(num_groups: int, cin: int, cout: int,
                            hw: int, howo: int, conv_first: bool):
    cpg = cin // num_groups
    inv_n = 1.0 / float(cpg * hw)

    def kernel(x_ref, gamma_ref, beta_ref, w_ref, b_ref, kpool_ref, o_ref):
        # x_ref:     (1, Cin, HW)   current batch element (lane-dense spatial)
        # gamma/beta:(Cin, 1)       GroupNorm affine params
        # w_ref:     (Cout, Cin)    1x1 conv weight
        # b_ref:     (Cout, 1)      conv bias
        # kpool_ref: (HW, HoWo)     constant 2x2 avg-pool matrix (kron(Ph,Pw)/4)
        # o_ref:     (1, Cout, HoWo)
        x = x_ref[0]                                   # (Cin, HW)
        gamma = gamma_ref[...]                         # (Cin, 1)
        beta = beta_ref[...]                           # (Cin, 1)

        # ---- GroupNorm statistics: one full pass for per-channel moments ----
        s = jnp.sum(x, axis=1, keepdims=True)          # (Cin, 1)
        ss = jnp.sum(x * x, axis=1, keepdims=True)     # (Cin, 1)

        # ---- Fold per-group stats + affine into per-channel scale/shift -----
        scales = []
        shifts = []
        for g in range(num_groups):                    # tiny, static unroll
            lo, hi = g * cpg, (g + 1) * cpg
            mean = jnp.sum(s[lo:hi, :], axis=0, keepdims=True) * inv_n   # (1,1)
            mean_sq = jnp.sum(ss[lo:hi, :], axis=0, keepdims=True) * inv_n
            var = mean_sq - mean * mean                # biased (torch)
            inv_std = lax.rsqrt(var + _GN_EPS)         # (1,1)
            scale_g = gamma[lo:hi, :] * inv_std        # (cpg, 1)
            shift_g = beta[lo:hi, :] - mean * scale_g  # (cpg, 1)
            scales.append(scale_g)
            shifts.append(shift_g)
        scale = jnp.concatenate(scales, axis=0)        # (Cin, 1)
        shift = jnp.concatenate(shifts, axis=0)        # (Cin, 1)

        # ---- Fused normalize + affine + ReLU: one pass over (Cin, HW) -------
        z = jnp.maximum(x * scale + shift, 0.0)        # (Cin, HW)

        # ---- 1x1 conv (channel mix) + AvgPool2d(2) as two MXU matmuls -------
        if conv_first:
            y = jnp.dot(w_ref[...], z,
                        preferred_element_type=jnp.float32)       # (Cout, HW)
            pooled = jnp.dot(y, kpool_ref[...],
                             preferred_element_type=jnp.float32)  # (Cout, HoWo)
        else:
            zp = jnp.dot(z, kpool_ref[...],
                         preferred_element_type=jnp.float32)      # (Cin, HoWo)
            pooled = jnp.dot(w_ref[...], zp,
                             preferred_element_type=jnp.float32)  # (Cout, HoWo)

        o_ref[0] = pooled + b_ref[...]                 # bias broadcast

    return kernel


def transition_layer_forward(x, gn_weight, gn_bias, conv_w, conv_b,
                             *, num_groups: int):
    """TransitionLayer forward: GroupNorm -> ReLU -> Conv2d(1x1) -> AvgPool2d(2).

    x:        (B, Cin, H, W) NCHW
    returns:  (B, Cin//2, H//2, W//2) NCHW
    """
    B, Cin, H, W = x.shape
    assert Cin % num_groups == 0, "Cin must be divisible by numGroups"
    assert H % 2 == 0 and W % 2 == 0, "AvgPool2d(2) needs even H, W"
    Cout = Cin // 2
    Ho, Wo = H // 2, W // 2
    HW, HoWo = H * W, Ho * Wo

    # Contiguity-preserving view (no transpose, no extra HBM pass).
    x2 = x.reshape(B, Cin, HW).astype(jnp.float32)

    # Constant separable 2x2 average-pooling matrix: (HW, HoWo).
    ph = jnp.repeat(jnp.eye(Ho, dtype=jnp.float32), 2, axis=0)   # (H, Ho)
    pw = jnp.repeat(jnp.eye(Wo, dtype=jnp.float32), 2, axis=0)   # (W, Wo)
    kpool = jnp.kron(ph, pw) * 0.25                              # (HW, HoWo)

    # Trace-time choice of matmul order (conv-then-pool vs pool-then-conv).
    cost_conv_first = Cout * HW * (Cin + HoWo)
    cost_pool_first = Cin * HoWo * (HW + Cout)
    conv_first = cost_conv_first <= cost_pool_first

    kernel = _make_transition_kernel(num_groups, Cin, Cout, HW, HoWo,
                                     conv_first)

    out_flat = pl.pallas_call(
        kernel,
        out_shape=jax.ShapeDtypeStruct((B, Cout, HoWo), jnp.float32),
        grid=(B,),
        in_specs=[
            pl.BlockSpec((1, Cin, HW), lambda b: (b, 0, 0)),     # x
            pl.BlockSpec((Cin, 1), lambda b: (0, 0)),            # gamma
            pl.BlockSpec((Cin, 1), lambda b: (0, 0)),            # beta
            pl.BlockSpec((Cout, Cin), lambda b: (0, 0)),         # conv weight
            pl.BlockSpec((Cout, 1), lambda b: (0, 0)),           # conv bias
            pl.BlockSpec((HW, HoWo), lambda b: (0, 0)),          # pool matrix
        ],
        out_specs=pl.BlockSpec((1, Cout, HoWo), lambda b: (b, 0, 0)),
        compiler_params=pltpu.CompilerParams(
            dimension_semantics=("parallel",)),
    )(
        x2,
        gn_weight.reshape(Cin, 1).astype(jnp.float32),
        gn_bias.reshape(Cin, 1).astype(jnp.float32),
        conv_w.reshape(Cout, Cin).astype(jnp.float32),
        conv_b.reshape(Cout, 1).astype(jnp.float32),
        kpool,
    )

    # Metadata-only reshape back to NCHW.
    return out_flat.reshape(B, Cout, Ho, Wo)


if __name__ == "__main__":
    key = jax.random.PRNGKey(0)
    B, Cin, H, W = 2, 4, 16, 16
    num_groups = 2
    Cout = Cin // 2

    kx, kg, kb, kw, kc = jax.random.split(key, 5)
    x = jax.random.normal(kx, (B, Cin, H, W), dtype=jnp.float32)
    gn_w = 1.0 + 0.1 * jax.random.normal(kg, (Cin,), dtype=jnp.float32)
    gn_b = 0.1 * jax.random.normal(kb, (Cin,), dtype=jnp.float32)
    conv_w = 0.1 * jax.random.normal(kw, (Cout, Cin), dtype=jnp.float32)
    conv_b = 0.01 * jax.random.normal(kc, (Cout,), dtype=jnp.float32)

    fwd = jax.jit(functools.partial(transition_layer_forward,
                                    num_groups=num_groups))
    out = fwd(x, gn_w, gn_b, conv_w, conv_b)
    jax.block_until_ready(out)

    # Pure-JAX reference (GroupNorm -> ReLU -> 1x1 conv -> AvgPool2d(2)).
    def reference(xr, gw, gb, cw, cb):
        Bq, C, Hq, Wq = xr.shape
        xg = xr.reshape(Bq, num_groups, C // num_groups, Hq, Wq)
        m = xg.mean(axis=(2, 3, 4), keepdims=True)
        v = jnp.square(xg - m).mean(axis=(2, 3, 4), keepdims=True)
        xn = ((xg - m) / jnp.sqrt(v + _GN_EPS)).reshape(Bq, C, Hq, Wq)
        z = jnp.maximum(xn * gw[None, :, None, None] + gb[None, :, None, None],
                        0.0)
        y = jnp.einsum("oc,bchw->bohw", cw, z) + cb[None, :, None, None]
        return y.reshape(Bq, -1, Hq // 2, 2, Wq // 2, 2).mean(axis=(3, 5))

    ref = reference(x, gn_w, gn_b, conv_w, conv_b)
    assert out.shape == (B, Cout, H // 2, W // 2)
    assert out.dtype == jnp.float32
    max_err = float(jnp.max(jnp.abs(out - ref)))
    assert jnp.allclose(out, ref, rtol=1e-4, atol=1e-4), max_err
    print("KERNEL_OK")
</pallas_src>

<mosaic_0001>
module attributes {stable_mosaic.version = 11 : i64} {
  func.func @kernel(%arg0: i32, %arg1: memref<1x4x256xf32, #tpu.memory_space<vmem>>, %arg2: memref<4x1xf32, #tpu.memory_space<vmem>>, %arg3: memref<4x1xf32, #tpu.memory_space<vmem>>, %arg4: memref<2x4xf32, #tpu.memory_space<vmem>>, %arg5: memref<2x1xf32, #tpu.memory_space<vmem>>, %arg6: memref<256x64xf32, #tpu.memory_space<vmem>>, %arg7: memref<1x2x64xf32, #tpu.memory_space<vmem>>) attributes {dimension_semantics = [#tpu.dimension_semantics<parallel>], iteration_bounds = array<i64: 2>, scalar_prefetch = 0 : i64, scratch_operands = 0 : i64, tpu.core_type = #tpu.core_type<tc>, window_params = [{transform_indices = @transform_0, window_bounds = array<i64: 1, 4, 256>}, {pipeline_mode = #tpu.pipeline_mode<synchronous>, transform_indices = @transform_1, window_bounds = array<i64: 4, 1>}, {pipeline_mode = #tpu.pipeline_mode<synchronous>, transform_indices = @transform_2, window_bounds = array<i64: 4, 1>}, {pipeline_mode = #tpu.pipeline_mode<synchronous>, transform_indices = @transform_3, window_bounds = array<i64: 2, 4>}, {pipeline_mode = #tpu.pipeline_mode<synchronous>, transform_indices = @transform_4, window_bounds = array<i64: 2, 1>}, {pipeline_mode = #tpu.pipeline_mode<synchronous>, transform_indices = @transform_5, window_bounds = array<i64: 256, 64>}, {transform_indices = @transform_6, window_bounds = array<i64: 1, 2, 64>}]} {
    %c0 = arith.constant 0 : index
    %c0_0 = arith.constant 0 : index
    %c0_1 = arith.constant 0 : index
    %0 = vector.load %arg1[%c0, %c0_0, %c0_1] : memref<1x4x256xf32, #tpu.memory_space<vmem>>, vector<1x4x256xf32>
    %1 = vector.shape_cast %0 : vector<1x4x256xf32> to vector<4x256xf32>
    %c0_2 = arith.constant 0 : index
    %c0_3 = arith.constant 0 : index
    %2 = vector.load %arg2[%c0_2, %c0_3] : memref<4x1xf32, #tpu.memory_space<vmem>>, vector<4x1xf32>
    %c0_4 = arith.constant 0 : index
    %c0_5 = arith.constant 0 : index
    %3 = vector.load %arg3[%c0_4, %c0_5] : memref<4x1xf32, #tpu.memory_space<vmem>>, vector<4x1xf32>
    %cst = arith.constant dense<0.000000e+00> : vector<4xf32>
    %4 = vector.multi_reduction <add>, %1, %cst [1] : vector<4x256xf32> to vector<4xf32>
    %5 = vector.shape_cast %4 : vector<4xf32> to vector<4x1xf32>
    %6 = arith.mulf %1, %1 : vector<4x256xf32>
    %cst_6 = arith.constant dense<0.000000e+00> : vector<4xf32>
    %7 = vector.multi_reduction <add>, %6, %cst_6 [1] : vector<4x256xf32> to vector<4xf32>
    %8 = vector.shape_cast %7 : vector<4xf32> to vector<4x1xf32>
    %9 = vector.extract_strided_slice %5 {offsets = [0, 0], sizes = [2, 1], strides = [1, 1]} : vector<4x1xf32> to vector<2x1xf32>
    %cst_7 = arith.constant dense<0.000000e+00> : vector<1xf32>
    %10 = vector.multi_reduction <add>, %9, %cst_7 [0] : vector<2x1xf32> to vector<1xf32>
    %11 = vector.shape_cast %10 : vector<1xf32> to vector<1x1xf32>
    %cst_8 = arith.constant 0.001953125 : f32
    %12 = vector.broadcast %cst_8 : f32 to vector<1x1xf32>
    %13 = arith.mulf %11, %12 : vector<1x1xf32>
    %14 = vector.extract_strided_slice %8 {offsets = [0, 0], sizes = [2, 1], strides = [1, 1]} : vector<4x1xf32> to vector<2x1xf32>
    %cst_9 = arith.constant dense<0.000000e+00> : vector<1xf32>
    %15 = vector.multi_reduction <add>, %14, %cst_9 [0] : vector<2x1xf32> to vector<1xf32>
    %16 = vector.shape_cast %15 : vector<1xf32> to vector<1x1xf32>
    %cst_10 = arith.constant 0.001953125 : f32
    %17 = vector.broadcast %cst_10 : f32 to vector<1x1xf32>
    %18 = arith.mulf %16, %17 : vector<1x1xf32>
    %19 = arith.mulf %13, %13 : vector<1x1xf32>
    %20 = arith.subf %18, %19 : vector<1x1xf32>
    %cst_11 = arith.constant 9.99999974E-6 : f32
    %21 = vector.broadcast %cst_11 : f32 to vector<1x1xf32>
    %22 = arith.addf %20, %21 : vector<1x1xf32>
    %23 = math.rsqrt %22 : vector<1x1xf32>
    %24 = vector.extract_strided_slice %2 {offsets = [0, 0], sizes = [2, 1], strides = [1, 1]} : vector<4x1xf32> to vector<2x1xf32>
    %25 = vector.broadcast %23 : vector<1x1xf32> to vector<2x1xf32>
    %26 = arith.mulf %24, %25 : vector<2x1xf32>
    %27 = vector.extract_strided_slice %3 {offsets = [0, 0], sizes = [2, 1], strides = [1, 1]} : vector<4x1xf32> to vector<2x1xf32>
    %28 = vector.broadcast %13 : vector<1x1xf32> to vector<2x1xf32>
    %29 = arith.mulf %28, %26 : vector<2x1xf32>
    %30 = arith.subf %27, %29 : vector<2x1xf32>
    %31 = vector.extract_strided_slice %5 {offsets = [2, 0], sizes = [2, 1], strides = [1, 1]} : vector<4x1xf32> to vector<2x1xf32>
    %cst_12 = arith.constant dense<0.000000e+00> : vector<1xf32>
    %32 = vector.multi_reduction <add>, %31, %cst_12 [0] : vector<2x1xf32> to vector<1xf32>
    %33 = vector.shape_cast %32 : vector<1xf32> to vector<1x1xf32>
    %cst_13 = arith.constant 0.001953125 : f32
    %34 = vector.broadcast %cst_13 : f32 to vector<1x1xf32>
    %35 = arith.mulf %33, %34 : vector<1x1xf32>
    %36 = vector.extract_strided_slice %8 {offsets = [2, 0], sizes = [2, 1], strides = [1, 1]} : vector<4x1xf32> to vector<2x1xf32>
    %cst_14 = arith.constant dense<0.000000e+00> : vector<1xf32>
    %37 = vector.multi_reduction <add>, %36, %cst_14 [0] : vector<2x1xf32> to vector<1xf32>
    %38 = vector.shape_cast %37 : vector<1xf32> to vector<1x1xf32>
    %cst_15 = arith.constant 0.001953125 : f32
    %39 = vector.broadcast %cst_15 : f32 to vector<1x1xf32>
    %40 = arith.mulf %38, %39 : vector<1x1xf32>
    %41 = arith.mulf %35, %35 : vector<1x1xf32>
    %42 = arith.subf %40, %41 : vector<1x1xf32>
    %cst_16 = arith.constant 9.99999974E-6 : f32
    %43 = vector.broadcast %cst_16 : f32 to vector<1x1xf32>
    %44 = arith.addf %42, %43 : vector<1x1xf32>
    %45 = math.rsqrt %44 : vector<1x1xf32>
    %46 = vector.extract_strided_slice %2 {offsets = [2, 0], sizes = [2, 1], strides = [1, 1]} : vector<4x1xf32> to vector<2x1xf32>
    %47 = vector.broadcast %45 : vector<1x1xf32> to vector<2x1xf32>
    %48 = arith.mulf %46, %47 : vector<2x1xf32>
    %49 = vector.extract_strided_slice %3 {offsets = [2, 0], sizes = [2, 1], strides = [1, 1]} : vector<4x1xf32> to vector<2x1xf32>
    %50 = vector.broadcast %35 : vector<1x1xf32> to vector<2x1xf32>
    %51 = arith.mulf %50, %48 : vector<2x1xf32>
    %52 = arith.subf %49, %51 : vector<2x1xf32>
    %53 = tpu.concatenate %26, %48 in 0 : vector<2x1xf32>, vector<2x1xf32> -> vector<4x1xf32>
    %54 = tpu.concatenate %30, %52 in 0 : vector<2x1xf32>, vector<2x1xf32> -> vector<4x1xf32>
    %55 = vector.broadcast %53 : vector<4x1xf32> to vector<4x256xf32>
    %56 = arith.mulf %1, %55 : vector<4x256xf32>
    %57 = vector.broadcast %54 : vector<4x1xf32> to vector<4x256xf32>
    %58 = arith.addf %56, %57 : vector<4x256xf32>
    %cst_17 = arith.constant 0.000000e+00 : f32
    %59 = vector.broadcast %cst_17 : f32 to vector<4x256xf32>
    %60 = arith.maximumf %58, %59 : vector<4x256xf32>
    %c0_18 = arith.constant 0 : index
    %c0_19 = arith.constant 0 : index
    %61 = vector.load %arg4[%c0_18, %c0_19] : memref<2x4xf32, #tpu.memory_space<vmem>>, vector<2x4xf32>
    %cst_20 = arith.constant dense<0.000000e+00> : vector<2x256xf32>
    %62 = tpu.matmul %61, %60, %cst_20 {dimension_numbers = #tpu.dot_dimension_numbers<[1], [0], [0], [1], [0, 0, 1, 1], [], []>} : vector<2x4xf32>, vector<4x256xf32>, vector<2x256xf32> -> vector<2x256xf32>
    %c0_21 = arith.constant 0 : index
    %c0_22 = arith.constant 0 : index
    %63 = vector.load %arg6[%c0_21, %c0_22] : memref<256x64xf32, #tpu.memory_space<vmem>>, vector<256x64xf32>
    %cst_23 = arith.constant dense<0.000000e+00> : vector<2x64xf32>
    %64 = tpu.matmul %62, %63, %cst_23 {dimension_numbers = #tpu.dot_dimension_numbers<[1], [0], [0], [1], [0, 0, 1, 1], [], []>} : vector<2x256xf32>, vector<256x64xf32>, vector<2x64xf32> -> vector<2x64xf32>
    %c0_24 = arith.constant 0 : index
    %c0_25 = arith.constant 0 : index
    %65 = vector.load %arg5[%c0_24, %c0_25] : memref<2x1xf32, #tpu.memory_space<vmem>>, vector<2x1xf32>
    %66 = vector.broadcast %65 : vector<2x1xf32> to vector<2x64xf32>
    %67 = arith.addf %64, %66 : vector<2x64xf32>
    %c0_26 = arith.constant 0 : index
    %c0_27 = arith.constant 0 : index
    %c0_28 = arith.constant 0 : index
    %68 = vector.load %arg7[%c0_26, %c0_27, %c0_28] : memref<1x2x64xf32, #tpu.memory_space<vmem>>, vector<1x2x64xf32>
    %69 = vector.shape_cast %68 : vector<1x2x64xf32> to vector<2x64xf32>
    %70 = vector.shape_cast %67 : vector<2x64xf32> to vector<1x2x64xf32>
    tpu.vector_store %arg7[%c0_26, %c0_27, %c0_28], %70 {strides = array<i32>} : memref<1x2x64xf32, #tpu.memory_space<vmem>>, vector<1x2x64xf32>,
    return
  }
  func.func @transform_0(%arg0: i32) -> (i32, i32, i32) {
    %c0_i32 = arith.constant 0 : i32
    %c0_i32_0 = arith.constant 0 : i32
    %c0_i32_1 = arith.constant 0 : i32
    return %arg0, %c0_i32, %c0_i32_0 : i32, i32, i32
  }
  func.func @transform_1(%arg0: i32) -> (i32, i32) {
    %c0_i32 = arith.constant 0 : i32
    %c0_i32_0 = arith.constant 0 : i32
    %c0_i32_1 = arith.constant 0 : i32
    return %c0_i32, %c0_i32_0 : i32, i32
  }
  func.func @transform_2(%arg0: i32) -> (i32, i32) {
    %c0_i32 = arith.constant 0 : i32
    %c0_i32_0 = arith.constant 0 : i32
    %c0_i32_1 = arith.constant 0 : i32
    return %c0_i32, %c0_i32_0 : i32, i32
  }
  func.func @transform_3(%arg0: i32) -> (i32, i32) {
    %c0_i32 = arith.constant 0 : i32
    %c0_i32_0 = arith.constant 0 : i32
    %c0_i32_1 = arith.constant 0 : i32
    return %c0_i32, %c0_i32_0 : i32, i32
  }
  func.func @transform_4(%arg0: i32) -> (i32, i32) {
    %c0_i32 = arith.constant 0 : i32
    %c0_i32_0 = arith.constant 0 : i32
    %c0_i32_1 = arith.constant 0 : i32
    return %c0_i32, %c0_i32_0 : i32, i32
  }
  func.func @transform_5(%arg0: i32) -> (i32, i32) {
    %c0_i32 = arith.constant 0 : i32
    %c0_i32_0 = arith.constant 0 : i32
    %c0_i32_1 = arith.constant 0 : i32
    return %c0_i32, %c0_i32_0 : i32, i32
  }
  func.func @transform_6(%arg0: i32) -> (i32, i32, i32) {
    %c0_i32 = arith.constant 0 : i32
    %c0_i32_0 = arith.constant 0 : i32
    %c0_i32_1 = arith.constant 0 : i32
    return %arg0, %c0_i32, %c0_i32_0 : i32, i32, i32
  }
}

</mosaic_0001>

<llo_original>
// kernel: transition_layer_forward.1
$region0: #{transition_layer_forward.1}
  #allocation0 [shape = 'u32[]', space=smem, size = 0x4, offset = 0x4, fixed_abs, tag = 'smem constant byte address 0x4 - core index']
  #allocation1 [shape = 'u32[72,128]{1,0:T(1,128)}', space=vmem, size = 0x9000, scoped, tag = 'internal scratch']
  %s0 = inlined_call_operand.vmem [shape: f32[2,4,256], index: 0, kind: input, shape index: {}]
  %s1 = inlined_call_operand.vmem [shape: f32[4,1], index: 1, kind: input, shape index: {}]
  %s2 = inlined_call_operand.vmem [shape: f32[4,1], index: 2, kind: input, shape index: {}]
  %s3 = inlined_call_operand.vmem [shape: f32[2,4], index: 3, kind: input, shape index: {}]
  %s4 = inlined_call_operand.vmem [shape: f32[2,1], index: 4, kind: input, shape index: {}]
  %s5 = inlined_call_operand.vmem [shape: f32[256,64], index: 5, kind: input, shape index: {}]
  %s6 = inlined_call_operand.vmem [shape: f32[2,2,64], index: 6, kind: output, shape index: {}]
  %s7 = sld [smem:[#allocation0]]
  $region57: #{transition_layer_forward.1} parent=0
    _
  %s9 = ssub.s32 1, %s7
  %s10 = scalar_select 0, %s9, %s7
  loop: start=0, step=1, limit=4
  $region2: #{transition_layer_forward.1} parent=0 // loop_pre_header
    _
  $region3: #{transition_layer_forward.1} parent=0 // loop_header
    %s12 = sphi 0, %s16
    %p13 = scmp.ge.s32.totalorder %s12, 4
    %s22 = sphi 0, %s24
    %s25 = sphi 0, %s22
    %s26 = sphi 0, %s25
    %s42 = sphi 0, %s26
    %s46 = sphi 0, %s46
    %s48 = sphi 0, %s46
    %s49 = sphi 0, %s48
    %s63 = sphi 0, %s49
    %s67 = sphi 0, %s67
    %s69 = sphi 0, %s67
    %s70 = sphi 0, %s69
    %s84 = sphi 0, %s70
    %s88 = sphi 0, %s88
    %s90 = sphi 0, %s88
    %s91 = sphi 0, %s90
    %s105 = sphi 0, %s91
    %s109 = sphi 0, %s109
    %s111 = sphi 0, %s109
    %s112 = sphi 0, %s111
    %s126 = sphi 0, %s112
    %s130 = sphi 0, %s130
    %s132 = sphi 0, %s130
    %s133 = sphi 0, %s132
    %s147 = sphi 0, %s133
    %s153 = sphi 0, %s155
    %s156 = sphi 0, %s153
    %s157 = sphi 0, %s156
    %s173 = sphi 0, %s157
  $region4: #{transition_layer_forward.1} parent=0 // loop_header_branch
    %15 = sbr.rel (%p13) target = $region8
  $region5: #{transition_layer_forward.1} parent=0 // loop_body
    %s17 = ssub.s32 %s12, 1
    %s18 = ssub.s32 %s12, 2
    %s19 = sadd.s32 %s12, 1
    %s20 = ssub.s32 %s12, %s19
    %p21 = scmp.eq.s32.totalorder %s20, 0
    %s23 = sadd.s32 %s22, 1
    %s24 = scalar_select %p21, %s22, %s23
    %p27 = pneg %p21
    %p28 = scmp.eq.s32.totalorder %s12, 1
    %p29 = por %p27, %p28
    %p30 = scmp.ne.s32.totalorder %s22, %s25
    %p31 = scmp.eq.s32.totalorder %s12, 0
    %p32 = por %p30, %p31
    %p33 = scmp.ne.s32.totalorder %s22, %s25
    %p34 = scmp.eq.s32.totalorder %s17, 1
    %p35 = por %p33, %p34
    %p36 = scmp.ne.s32.totalorder %s25, %s26
    %p37 = scmp.eq.s32.totalorder %s17, 0
    %p38 = por %p36, %p37
    %p39 = scmp.ne.s32.totalorder %s25, %s26
    %p40 = scmp.eq.s32.totalorder %s18, 1
    %p41 = por %p39, %p40
    %p43 = scmp.ne.s32.totalorder %s26, %s42
    %p44 = scmp.eq.s32.totalorder %s18, 0
    %p45 = por %p43, %p44
    %s47 = sadd.s32 %s46, 1
    %p50 = scmp.eq.s32.totalorder %s12, 1
    %p51 = scmp.ne.s32.totalorder %s46, %s48
    %p52 = scmp.eq.s32.totalorder %s12, 0
    %p53 = por %p51, %p52
    %p54 = scmp.ne.s32.totalorder %s46, %s48
    %p55 = scmp.eq.s32.totalorder %s17, 1
    %p56 = por %p54, %p55
    %p57 = scmp.ne.s32.totalorder %s48, %s49
    %p58 = scmp.eq.s32.totalorder %s17, 0
    %p59 = por %p57, %p58
    %p60 = scmp.ne.s32.totalorder %s48, %s49
    %p61 = scmp.eq.s32.totalorder %s18, 1
    %p62 = por %p60, %p61
    %p64 = scmp.ne.s32.totalorder %s49, %s63
    %p65 = scmp.eq.s32.totalorder %s18, 0
    %p66 = por %p64, %p65
    %s68 = sadd.s32 %s67, 1
    %p71 = scmp.eq.s32.totalorder %s12, 1
    %p72 = scmp.ne.s32.totalorder %s67, %s69
    %p73 = scmp.eq.s32.totalorder %s12, 0
    %p74 = por %p72, %p73
    %p75 = scmp.ne.s32.totalorder %s67, %s69
    %p76 = scmp.eq.s32.totalorder %s17, 1
    %p77 = por %p75, %p76
    %p78 = scmp.ne.s32.totalorder %s69, %s70
    %p79 = scmp.eq.s32.totalorder %s17, 0
    %p80 = por %p78, %p79
    %p81 = scmp.ne.s32.totalorder %s69, %s70
    %p82 = scmp.eq.s32.totalorder %s18, 1
    %p83 = por %p81, %p82
    %p85 = scmp.ne.s32.totalorder %s70, %s84
    %p86 = scmp.eq.s32.totalorder %s18, 0
    %p87 = por %p85, %p86
    %s89 = sadd.s32 %s88, 1
    %p92 = scmp.eq.s32.totalorder %s12, 1
    %p93 = scmp.ne.s32.totalorder %s88, %s90
    %p94 = scmp.eq.s32.totalorder %s12, 0
    %p95 = por %p93, %p94
    %p96 = scmp.ne.s32.totalorder %s88, %s90
    %p97 = scmp.eq.s32.totalorder %s17, 1
    %p98 = por %p96, %p97
    %p99 = scmp.ne.s32.totalorder %s90, %s91
    %p100 = scmp.eq.s32.totalorder %s17, 0
    %p101 = por %p99, %p100
    %p102 = scmp.ne.s32.totalorder %s90, %s91
    %p103 = scmp.eq.s32.totalorder %s18, 1
    %p104 = por %p102, %p103
    %p106 = scmp.ne.s32.totalorder %s91, %s105
    %p107 = scmp.eq.s32.totalorder %s18, 0
    %p108 = por %p106, %p107
    %s110 = sadd.s32 %s109, 1
    %p113 = scmp.eq.s32.totalorder %s12, 1
    %p114 = scmp.ne.s32.totalorder %s109, %s111
    %p115 = scmp.eq.s32.totalorder %s12, 0
    %p116 = por %p114, %p115
    %p117 = scmp.ne.s32.totalorder %s109, %s111
    %p118 = scmp.eq.s32.totalorder %s17, 1
    %p119 = por %p117, %p118
    %p120 = scmp.ne.s32.totalorder %s111, %s112
    %p121 = scmp.eq.s32.totalorder %s17, 0
    %p122 = por %p120, %p121
    %p123 = scmp.ne.s32.totalorder %s111, %s112
    %p124 = scmp.eq.s32.totalorder %s18, 1
    %p125 = por %p123, %p124
    %p127 = scmp.ne.s32.totalorder %s112, %s126
    %p128 = scmp.eq.s32.totalorder %s18, 0
    %p129 = por %p127, %p128
    %s131 = sadd.s32 %s130, 1
    %p134 = scmp.eq.s32.totalorder %s12, 1
    %p135 = scmp.ne.s32.totalorder %s130, %s132
    %p136 = scmp.eq.s32.totalorder %s12, 0
    %p137 = por %p135, %p136
    %p138 = scmp.ne.s32.totalorder %s130, %s132
    %p139 = scmp.eq.s32.totalorder %s17, 1
    %p140 = por %p138, %p139
    %p141 = scmp.ne.s32.totalorder %s132, %s133
    %p142 = scmp.eq.s32.totalorder %s17, 0
    %p143 = por %p141, %p142
    %p144 = scmp.ne.s32.totalorder %s132, %s133
    %p145 = scmp.eq.s32.totalorder %s18, 1
    %p146 = por %p144, %p145
    %p148 = scmp.ne.s32.totalorder %s133, %s147
    %p149 = scmp.eq.s32.totalorder %s18, 0
    %p150 = por %p148, %p149
    %s151 = ssub.s32 %s12, %s19
    %p152 = scmp.eq.s32.totalorder %s151, 0
    %s154 = sadd.s32 %s153, 1
    %s155 = scalar_select %p152, %s153, %s154
    %p158 = pneg %p152
    %p159 = scmp.eq.s32.totalorder %s12, 1
    %p160 = por %p158, %p159
    %p161 = scmp.ne.s32.totalorder %s153, %s156
    %p162 = scmp.eq.s32.totalorder %s12, 0
    %p163 = por %p161, %p162
    %p164 = scmp.ne.s32.totalorder %s153, %s156
    %p165 = scmp.eq.s32.totalorder %s17, 1
    %p166 = por %p164, %p165
    %p167 = scmp.ne.s32.totalorder %s156, %s157
    %p168 = scmp.eq.s32.totalorder %s17, 0
    %p169 = por %p167, %p168
    %p170 = scmp.ne.s32.totalorder %s156, %s157
    %p171 = scmp.eq.s32.totalorder %s18, 1
    %p172 = por %p170, %p171
    %p174 = scmp.ne.s32.totalorder %s157, %s173
    %p175 = scmp.eq.s32.totalorder %s18, 0
    %p176 = por %p174, %p175
    %p177 = scmp.le.s32.totalorder 1, %s12
    %p178 = scmp.lt.s32.totalorder %s12, 3
    %p179 = pnand %p177, %p178
    %p180 = pneg %p179
    // Predicated region
    $region9: #{transition_layer_forward.1} parent=5 // pred_check
      _
    $region10: #{transition_layer_forward.1} parent=5 // pred_check_branch
      %182 = sbr.rel (%p179) target = $region12
    $region11: #{transition_layer_forward.1} parent=5 // pred_region
      %s183 = ssub.s32 %s12, 1
      // Predicated region
      $region13: #{transition_layer_forward.1} parent=11 // pred_check
        %p184 = pneg %p59
      $region14: #{transition_layer_forward.1} parent=11 // pred_check_branch
        %186 = sbr.rel (%p184) target = $region16
      $region15: #{transition_layer_forward.1} parent=11 // pred_region
        _
      $region16: #{transition_layer_forward.1} parent=11 // pred_fallthru
        _
      // Predicated region
      $region17: #{transition_layer_forward.1} parent=11 // pred_check
        %p187 = pneg %p80
      $region18: #{transition_layer_forward.1} parent=11 // pred_check_branch
        %189 = sbr.rel (%p187) target = $region20
      $region19: #{transition_layer_forward.1} parent=11 // pred_region
        _
      $region20: #{transition_layer_forward.1} parent=11 // pred_fallthru
        _
      // Predicated region
      $region21: #{transition_layer_forward.1} parent=11 // pred_check
        %p190 = pneg %p101
      $region22: #{transition_layer_forward.1} parent=11 // pred_check_branch
        %192 = sbr.rel (%p190) target = $region24
      $region23: #{transition_layer_forward.1} parent=11 // pred_region
        _
      $region24: #{transition_layer_forward.1} parent=11 // pred_fallthru
        _
      // Predicated region
      $region25: #{transition_layer_forward.1} parent=11 // pred_check
        %p193 = pneg %p122
      $region26: #{transition_layer_forward.1} parent=11 // pred_check_branch
        %195 = sbr.rel (%p193) target = $region28
      $region27: #{transition_layer_forward.1} parent=11 // pred_region
        _
      $region28: #{transition_layer_forward.1} parent=11 // pred_fallthru
        _
      // Predicated region
      $region29: #{transition_layer_forward.1} parent=11 // pred_check
        %p196 = pneg %p143
      $region30: #{transition_layer_forward.1} parent=11 // pred_check_branch
        %198 = sbr.rel (%p196) target = $region32
      $region31: #{transition_layer_forward.1} parent=11 // pred_region
        _
      $region32: #{transition_layer_forward.1} parent=11 // pred_fallthru
        _
    $region12: #{transition_layer_forward.1} parent=5 // pred_fallthru
      _
    %p199 = scmp.lt.s32.totalorder %s12, 2
    // Predicated region
    $region33: #{transition_layer_forward.1} parent=5 // pred_check
      %p200 = pneg %p199
    $region34: #{transition_layer_forward.1} parent=5 // pred_check_branch
      %202 = sbr.rel (%p200) target = $region36
    $region35: #{transition_layer_forward.1} parent=5 // pred_region
      // Predicated region
      $region37: #{transition_layer_forward.1} parent=35 // pred_check
        %p203 = pneg %p32
      $region38: #{transition_layer_forward.1} parent=35 // pred_check_branch
        %205 = sbr.rel (%p203) target = $region40
      $region39: #{transition_layer_forward.1} parent=35 // pred_region
        %p206 = scmp.lt.s32.totalorder %s12, 1
        %s207 = scalar_select %p206, %s12, 1
        %s208 = smul.addr %s207, 2
        %s209 = smul.addr %s208, 4
        %s210 = scalar_lea.vmem %s0, %s209
      $region40: #{transition_layer_forward.1} parent=35 // pred_fallthru
        _
    $region36: #{transition_layer_forward.1} parent=5 // pred_fallthru
      _
    %p211 = scmp.le.s32.totalorder 1, %s12
    %p212 = scmp.lt.s32.totalorder %s12, 3
    %p213 = pnand %p211, %p212
    %p214 = pneg %p213
    // Predicated region
    $region41: #{transition_layer_forward.1} parent=5 // pred_check
      _
    $region42: #{transition_layer_forward.1} parent=5 // pred_check_branch
      %216 = sbr.rel (%p213) target = $region44
    $region43: #{transition_layer_forward.1} parent=5 // pred_region
      %s217 = ssub.s32 %s12, 1
      %p218 = scmp.lt.s32.totalorder %s17, 1
      %s219 = scalar_select %p218, %s17, 1
      %s220 = smul.addr %s219, 2
      %s221 = smul.addr %s220, 4
      %s222 = scalar_lea.vmem %s0, %s221
      %p223 = pneg %p38
      %p224 = pneg %p35
      %p225 = pneg %p59
      %p226 = pneg %p56
      %p227 = pneg %p80
      %p228 = pneg %p77
      %p229 = pneg %p101
      %p230 = pneg %p98
      %p231 = pneg %p122
      %p232 = pneg %p119
      %p233 = pneg %p143
      %p234 = pneg %p140
      %p235 = pneg %p169
      %p236 = pneg %p166
      %p237 = scmp.lt.s32.totalorder %s17, 1
      %s238 = scalar_select %p237, %s17, 1
      %s239 = smul.addr %s238, 2
      %s240 = scalar_lea.vmem %s6, %s239
      %p241 = scmp.lt.s32.totalorder %s17, 1
      %s242 = scalar_select %p241, %s17, 1
      %s243 = smul.addr %s242, 2
      %s244 = smul.addr %s243, 4
      %s245 = scalar_lea.vmem %s0, %s244
      %p246 = scmp.lt.s32.totalorder %s17, 1
      %s247 = scalar_select %p246, %s17, 1
      %s248 = smul.addr %s247, 2
      %s249 = scalar_lea.vmem %s6, %s248
      %v250 = vld [vmem:[%s245] sm:$0xff]
      %v251 = vld [vmem:[%s1] sm:$0xf]
      %v252 = vld [vmem:[%s2] sm:$0xf]
      %254 = vst [vmem:[#allocation1] ss:$2 sm:$0xff] %v250
      %v255 = vld.sshfl [vmem:[#allocation1] sm:$0xff pattern:$0x75316420]
      %v256 = vld.sshfl [vmem:[#allocation1 + $0x8] sm:$0xff pattern:$0x75316420]
      %vm259 = vcmask 1043456
      %v260 = vsel %vm259, %v255, 0.0
      %v261 = vsel %vm259, %v256, 0.0
      %v262 = vadd.f32 %v260, %v261
      %263 = vadd.xlane.f32.xlu0 %v262
      %v264 = vpop.xlane.xlu0 %263
      %v265 = vmul.f32 %v250, %v250
      %267 = vst [vmem:[#allocation1] ss:$2 sm:$0xff] %v265
      %v268 = vld.sshfl [vmem:[#allocation1] sm:$0xff pattern:$0x75316420]
      %v269 = vld.sshfl [vmem:[#allocation1 + $0x8] sm:$0xff pattern:$0x75316420]
      %v272 = vsel %vm259, %v268, 0.0
      %v273 = vsel %vm259, %v269, 0.0
      %v274 = vadd.f32 %v272, %v273
      %275 = vadd.xlane.f32.xlu0 %v274
      %v276 = vpop.xlane.xlu0 %275
      %vm277 = vcmask 1041408
      %v278 = vsel %vm277, %v264, 0.0
      %v279 = vrot.slane %v278, 4
      %v280 = vadd.f32 %v278, %v279
      %v281 = vrot.slane %v280, 2
      %v282 = vadd.f32 %v280, %v281
      %v283 = vrot.slane %v282, 1
      %v284 = vadd.f32 %v282, %v283
      %v285 = vmul.f32 %v284, 0.001953125
      %v286 = vsel %vm277, %v276, 0.0
      %v287 = vrot.slane %v286, 4
      %v288 = vadd.f32 %v286, %v287
      %v289 = vrot.slane %v288, 2
      %v290 = vadd.f32 %v288, %v289
      %v291 = vrot.slane %v290, 1
      %v292 = vadd.f32 %v290, %v291
      %v293 = vmul.f32 %v292, 0.001953125
      %v294 = vmul.f32 %v285, %v285
      %v295 = vsub.f32 %v293, %v294
      %v296 = vadd.f32 %v295, 1e-05
      %v297 = vrsqrt.pop %v296
      %v298 = vmul.f32 %v297, %v296
      %v299 = vmul.f32 %v298, %v297
      %v300 = vmul.f32 0.5, %v299
      %v301 = vsub.f32 1.5, %v300
      %v302 = vmul.f32 %v297, %v301
      %vm303 = vweird.f32 %v296
      %vm304 = vweird.f32 %v297
      %vm305 = vmor %vm303, %vm304
      %v306 = vsel %vm305, %v297, %v302
      %v307 = vmul.f32 %v251, %v306
      %v308 = vmul.f32 %v285, %v307
      %v309 = vsub.f32 %v252, %v308
      %v311 = vrot.slane %v264, 2
      %v313 = vsel %vm277, %v311, 0.0
      %v314 = vrot.slane %v313, 4
      %v315 = vadd.f32 %v313, %v314
      %v316 = vrot.slane %v315, 2
      %v317 = vadd.f32 %v315, %v316
      %v318 = vrot.slane %v317, 1
      %v319 = vadd.f32 %v317, %v318
      %v320 = vmul.f32 %v319, 0.001953125
      %v322 = vrot.slane %v276, 2
      %v324 = vsel %vm277, %v322, 0.0
      %v325 = vrot.slane %v324, 4
      %v326 = vadd.f32 %v324, %v325
      %v327 = vrot.slane %v326, 2
      %v328 = vadd.f32 %v326, %v327
      %v329 = vrot.slane %v328, 1
      %v330 = vadd.f32 %v328, %v329
      %v331 = vmul.f32 %v330, 0.001953125
      %v332 = vmul.f32 %v320, %v320
      %v333 = vsub.f32 %v331, %v332
      %v334 = vadd.f32 %v333, 1e-05
      %v335 = vrsqrt.pop %v334
      %v336 = vmul.f32 %v335, %v334
      %v337 = vmul.f32 %v336, %v335
      %v338 = vmul.f32 0.5, %v337
      %v339 = vsub.f32 1.5, %v338
      %v340 = vmul.f32 %v335, %v339
      %vm341 = vweird.f32 %v334
      %vm342 = vweird.f32 %v335
      %vm343 = vmor %vm341, %vm342
      %v344 = vsel %vm343, %v335, %v340
      %v345 = vmul.f32 %v251, %v344
      %v346 = vmul.f32 %v320, %v345
      %v347 = vsub.f32 %v252, %v346
      %v348 = vsel %vm277, %v307, %v345
      %v349 = vsel %vm277, %v309, %v347
      %351 = vset.pattern.permute.xlu0 0
      %352 = vperm.xlu0 %351, %v348
      %v353 = vpop.permute.xlu0 %352
      %v355 = vunpack.c.l.s4 839922192
      %v356 = vunpack.c.0.s8 %v355
      %v357 = vperm.slane %v353, %v356
      %v359 = vmul.f32 %v250, %v357
      %361 = vset.pattern.permute.xlu0 0
      %362 = vperm.xlu0 %361, %v349
      %v363 = vpop.permute.xlu0 %362
      %v365 = vunpack.c.l.s4 839922192
      %v366 = vunpack.c.0.s8 %v365
      %v367 = vperm.slane %v363, %v366
      %v369 = vadd.f32 %v359, %v367
      %v370 = vmax.f32 %v369, 0.0
      %v371 = vld [vmem:[%s3] sm:$0x3]
      %373 = vst [vmem:[#allocation1] ss:$2 sm:$0xff] %v370
      %v374 = vld.sshfl [vmem:[#allocation1] sm:$0xff pattern:$0x75316420]
      %v375 = vld.sshfl [vmem:[#allocation1 + $0x8] sm:$0xff pattern:$0x75316420]
      %vm376 = vcmask 31744
      %v378 = vsel %vm376, %v371, 0
      %v380 = vsel %vm259, %v374, 0
      %v382 = vsel %vm259, %v375, 0
      %384 = vmatpush.msra.mxu0 0.0
      %385 = vmatpush.msra.mxu0 0.0
      %386 = vmatpush.msra.mxu0 0.0
      %387 = vmatpush.msra.mxu0 0.0
      %388 = vmatpush.msra.mxu0 0.0
      %389 = vmatpush.msra.mxu0 0.0
      %390 = vmatpush.msra.mxu0 0.0
      %391 = vmatpush.msra.mxu0 0.0
      %392 = vmatpush.msra.mxu0 0.0
      %393 = vmatpush.msra.mxu0 0.0
      %394 = vmatpush.msra.mxu0 0.0
      %395 = vmatpush.msra.mxu0 0.0
      %396 = vmatpush.msra.mxu0 0.0
      %397 = vmatpush.msra.mxu0 0.0
      %398 = vmatpush.msra.mxu0 0.0
      %399 = vmatpush.msra.mxu0 %v380
      %400 = vmatmul.f32.gmra.mxu0 %v378
      %v401 = vpop.f32.mrf.mxu0
      %v402 = vadd.f32 0.0, %v401
      %403 = vdwg.mxu0
      %404 = vmatpush.msra.mxu0 0.0
      %405 = vmatpush.msra.mxu0 0.0
      %406 = vmatpush.msra.mxu0 0.0
      %407 = vmatpush.msra.mxu0 0.0
      %408 = vmatpush.msra.mxu0 0.0
      %409 = vmatpush.msra.mxu0 0.0
      %410 = vmatpush.msra.mxu0 0.0
      %411 = vmatpush.msra.mxu0 0.0
      %412 = vmatpush.msra.mxu0 0.0
      %413 = vmatpush.msra.mxu0 0.0
      %414 = vmatpush.msra.mxu0 0.0
      %415 = vmatpush.msra.mxu0 0.0
      %416 = vmatpush.msra.mxu0 0.0
      %417 = vmatpush.msra.mxu0 0.0
      %418 = vmatpush.msra.mxu0 0.0
      %419 = vmatpush.msra.mxu0 %v382
      %420 = vmatmul.f32.gmra.mxu0 %v378
      %v421 = vpop.f32.mrf.mxu0
      %v422 = vadd.f32 0.0, %v421
      %423 = vdwg.mxu0
      %v424 = vld [vmem:[%s5] sm:$0xff]
      %v425 = vld [vmem:[%s5 + $0x8] sm:$0xff]
      %v426 = vld [vmem:[%s5 + $0x10] sm:$0xff]
      %v427 = vld [vmem:[%s5 + $0x18] sm:$0xff]
      %v428 = vld [vmem:[%s5 + $0x20] sm:$0xff]
      %v429 = vld [vmem:[%s5 + $0x28] sm:$0xff]
      %v430 = vld [vmem:[%s5 + $0x30] sm:$0xff]
      %v431 = vld [vmem:[%s5 + $0x38] sm:$0xff]
      %v432 = vld [vmem:[%s5 + $0x40] sm:$0xff]
      %v433 = vld [vmem:[%s5 + $0x48] sm:$0xff]
      %v434 = vld [vmem:[%s5 + $0x50] sm:$0xff]
      %v435 = vld [vmem:[%s5 + $0x58] sm:$0xff]
      %v436 = vld [vmem:[%s5 + $0x60] sm:$0xff]
      %v437 = vld [vmem:[%s5 + $0x68] sm:$0xff]
      %v438 = vld [vmem:[%s5 + $0x70] sm:$0xff]
      %v439 = vld [vmem:[%s5 + $0x78] sm:$0xff]
      %v440 = vld [vmem:[%s5 + $0x80] sm:$0xff]
      %v441 = vld [vmem:[%s5 + $0x88] sm:$0xff]
      %v442 = vld [vmem:[%s5 + $0x90] sm:$0xff]
      %v443 = vld [vmem:[%s5 + $0x98] sm:$0xff]
      %v444 = vld [vmem:[%s5 + $0xa0] sm:$0xff]
      %v445 = vld [vmem:[%s5 + $0xa8] sm:$0xff]
      %v446 = vld [vmem:[%s5 + $0xb0] sm:$0xff]
      %v447 = vld [vmem:[%s5 + $0xb8] sm:$0xff]
      %v448 = vld [vmem:[%s5 + $0xc0] sm:$0xff]
      %v449 = vld [vmem:[%s5 + $0xc8] sm:$0xff]
      %v450 = vld [vmem:[%s5 + $0xd0] sm:$0xff]
      %v451 = vld [vmem:[%s5 + $0xd8] sm:$0xff]
      %v452 = vld [vmem:[%s5 + $0xe0] sm:$0xff]
      %v453 = vld [vmem:[%s5 + $0xe8] sm:$0xff]
      %v454 = vld [vmem:[%s5 + $0xf0] sm:$0xff]
      %v455 = vld [vmem:[%s5 + $0xf8] sm:$0xff]
      %v456 = vld [vmem:[%s4] sm:$0x3]
      %458 = vset.pattern.permute.xlu0 0
      %459 = vperm.xlu0 %458, %v456
      %v460 = vpop.permute.xlu0 %459
      %462 = vmatpush.msra.mxu0 %v439
      %463 = vmatpush.msra.mxu0 %v438
      %464 = vmatpush.msra.mxu0 %v437
      %465 = vmatpush.msra.mxu0 %v436
      %466 = vmatpush.msra.mxu0 %v435
      %467 = vmatpush.msra.mxu0 %v434
      %468 = vmatpush.msra.mxu0 %v433
      %469 = vmatpush.msra.mxu0 %v432
      %470 = vmatpush.msra.mxu0 %v431
      %471 = vmatpush.msra.mxu0 %v430
      %472 = vmatpush.msra.mxu0 %v429
      %473 = vmatpush.msra.mxu0 %v428
      %474 = vmatpush.msra.mxu0 %v427
      %475 = vmatpush.msra.mxu0 %v426
      %476 = vmatpush.msra.mxu0 %v425
      %477 = vmatpush.msra.mxu0 %v424
      %478 = vmatmul.f32.gmra.mxu0 %v402
      %v479 = vpop.f32.mrf.mxu0
      %v480 = vadd.f32 %v460, %v479
      %481 = vdwg.mxu0
      %482 = vmatpush.msra.mxu0 %v455
      %483 = vmatpush.msra.mxu0 %v454
      %484 = vmatpush.msra.mxu0 %v453
      %485 = vmatpush.msra.mxu0 %v452
      %486 = vmatpush.msra.mxu0 %v451
      %487 = vmatpush.msra.mxu0 %v450
      %488 = vmatpush.msra.mxu0 %v449
      %489 = vmatpush.msra.mxu0 %v448
      %490 = vmatpush.msra.mxu0 %v447
      %491 = vmatpush.msra.mxu0 %v446
      %492 = vmatpush.msra.mxu0 %v445
      %493 = vmatpush.msra.mxu0 %v444
      %494 = vmatpush.msra.mxu0 %v443
      %495 = vmatpush.msra.mxu0 %v442
      %496 = vmatpush.msra.mxu0 %v441
      %497 = vmatpush.msra.mxu0 %v440
      %498 = vmatmul.f32.gmra.mxu0 %v422
      %v499 = vpop.f32.mrf.mxu0
      %v500 = vadd.f32 %v480, %v499
      %501 = vdwg.mxu0
      %vm502 = vcmask 517120
      %503 = vst.msk [vmem:[%s249] sm:$0x3] %vm502, %v500
      %p504 = scmp.lt.s32.totalorder %s17, 1
      %s505 = scalar_select %p504, %s17, 1
      %s506 = smul.addr %s505, 2
      %s507 = scalar_lea.vmem %s6, %s506
      // Predicated region
      $region45: #{transition_layer_forward.1} parent=43 // pred_check
        %p508 = pneg %p166
      $region46: #{transition_layer_forward.1} parent=43 // pred_check_branch
        %510 = sbr.rel (%p508) target = $region48
      $region47: #{transition_layer_forward.1} parent=43 // pred_region
        _
      $region48: #{transition_layer_forward.1} parent=43 // pred_fallthru
        _
    $region44: #{transition_layer_forward.1} parent=5 // pred_fallthru
      _
    %p511 = scmp.le.s32.totalorder 2, %s12
    // Predicated region
    $region49: #{transition_layer_forward.1} parent=5 // pred_check
      %p512 = pneg %p511
    $region50: #{transition_layer_forward.1} parent=5 // pred_check_branch
      %514 = sbr.rel (%p512) target = $region52
    $region51: #{transition_layer_forward.1} parent=5 // pred_region
      %s515 = ssub.s32 %s12, 2
      // Predicated region
      $region53: #{transition_layer_forward.1} parent=51 // pred_check
        %p516 = pneg %p172
      $region54: #{transition_layer_forward.1} parent=51 // pred_check_branch
        %518 = sbr.rel (%p516) target = $region56
      $region55: #{transition_layer_forward.1} parent=51 // pred_region
        %p519 = scmp.lt.s32.totalorder %s18, 1
        %s520 = scalar_select %p519, %s18, 1
        %s521 = smul.addr %s520, 2
        %s522 = scalar_lea.vmem %s6, %s521
      $region56: #{transition_layer_forward.1} parent=51 // pred_fallthru
        _
    $region52: #{transition_layer_forward.1} parent=5 // pred_fallthru
      _
  $region6: #{transition_layer_forward.1} parent=0 // loop_footer
    %s16 = sadd.s32 1, %s12
  $region7: #{transition_layer_forward.1} parent=0 // loop_footer_branch
    %11 = sbr.rel target = $region3
  $region8: #{transition_layer_forward.1} parent=0 // loop_exit
    _

</llo_original>
